<compile_context>
chip_gen: v7x
topology: tpu7x:2x2x1
jax: 0.10.0
libtpu: 0.0.40
codegen_flags: <defaults>
</compile_context>

<pallas_src>
import jax
import jax.numpy as jnp
from jax.experimental import pallas as pl
from jax.experimental.pallas import tpu as pltpu

LANE = 128  # TPU lane width


def _round_up(x, m):
    return ((x + m - 1) // m) * m


def _choose_tm(n, tm_max=1024):
    """Row tile: multiple of 8, capped at tm_max, and >=2 grid steps when n > 8
    so the 'parallel' batch axis feeds both TensorCores on v7x."""
    if n <= 8:
        return 8
    half = _round_up((n + 1) // 2, 8)
    return min(tm_max, half)


def _logreg_kernel(x_ref, w_ref, b_ref, o_ref):
    # MXU matmul (bf16 or f32 inputs) with f32 accumulation at lane-padded
    # width, then slice to the true class count for a narrow (low-HBM) store.
    acc = jnp.dot(x_ref[...], w_ref[...], preferred_element_type=jnp.float32)
    nc = o_ref.shape[-1]
    o_ref[...] = (acc[:, :nc] + b_ref[...]).astype(o_ref.dtype)


def prepare_logreg_params(weight, bias, use_bf16=True):
    """One-time parameter prep (do NOT call per forward).

    weight: [nb_classes, ft_in] (torch Linear layout), bias: [nb_classes].
    Returns W_T lane-padded to 128 for the MXU (bf16 by default) and the bias
    as a (1, nb_classes) f32 row.
    """
    nb_classes, ft_in = weight.shape
    nc_pad = _round_up(max(nb_classes, LANE), LANE)
    w_dtype = jnp.bfloat16 if use_bf16 else weight.dtype
    w_t_pad = (
        jnp.zeros((ft_in, nc_pad), w_dtype)
        .at[:, :nb_classes]
        .set(weight.T.astype(w_dtype))
    )
    b2d = bias.reshape(1, nb_classes).astype(jnp.float32)
    return w_t_pad, b2d, nb_classes


def logreg_forward(seq, w_t_pad, b2d, nb_classes, tm_max=1024):
    """seq: [N, ft_in]. Returns f32 [N, nb_classes] = seq @ W.T + b."""
    n, ft_in = seq.shape
    nc_pad = w_t_pad.shape[1]

    # Cast activations to the (bf16) weight dtype: halves the dominant HBM
    # read; accumulation stays f32 inside the kernel.
    seq = seq.astype(w_t_pad.dtype)

    tm = _choose_tm(n, tm_max)
    grid = (pl.cdiv(n, tm),)

    bytes_accessed = (
        n * ft_in * seq.dtype.itemsize
        + w_t_pad.size * w_t_pad.dtype.itemsize
        + b2d.size * 4
        + n * nb_classes * 4
    )
    cost = pl.CostEstimate(
        flops=2 * n * ft_in * nc_pad,
        transcendentals=0,
        bytes_accessed=bytes_accessed,
    )

    out = pl.pallas_call(
        _logreg_kernel,
        out_shape=jax.ShapeDtypeStruct((n, nb_classes), jnp.float32),
        grid_spec=pl.GridSpec(
            grid=grid,
            in_specs=[
                pl.BlockSpec((tm, ft_in), lambda i: (i, 0)),        # x row tile
                pl.BlockSpec((ft_in, nc_pad), lambda i: (0, 0)),    # W_T (VMEM-resident)
                pl.BlockSpec((1, nb_classes), lambda i: (0, 0)),    # bias (VMEM-resident)
            ],
            out_specs=pl.BlockSpec((tm, nb_classes), lambda i: (i, 0)),
        ),
        compiler_params=pltpu.CompilerParams(
            dimension_semantics=("parallel",),  # independent row tiles -> megacore on v7x
        ),
        cost_estimate=cost,
    )(seq, w_t_pad, b2d)

    return out


def xavier_uniform(key, shape, dtype=jnp.float32):
    # torch.nn.init.xavier_uniform_ for a Linear weight [out, in]
    fan_out, fan_in = shape
    limit = (6.0 / (fan_in + fan_out)) ** 0.5
    return jax.random.uniform(key, shape, dtype, minval=-limit, maxval=limit)


if __name__ == "__main__":
    key = jax.random.PRNGKey(0)
    k_x, k_w = jax.random.split(key)

    batch, ft_in, nb_classes = 8, 32, 8

    seq = jax.random.normal(k_x, (batch, ft_in), dtype=jnp.float32)
    weight = xavier_uniform(k_w, (nb_classes, ft_in))      # torch Linear weight layout
    bias = jnp.zeros((nb_classes,), dtype=jnp.float32)     # bias.data.fill_(0.0)

    # One-time param prep (transpose + lane-pad + bf16 cast), then the forward.
    w_t_pad, b2d, nc = prepare_logreg_params(weight, bias)
    out = jax.block_until_ready(logreg_forward(seq, w_t_pad, b2d, nc))

    assert out.shape == (batch, nb_classes)
    assert out.dtype == jnp.float32

    # Tight check against a reference with identically bf16-cast inputs
    # (kernel accumulates in f32 on the MXU).
    seq_b = seq.astype(jnp.bfloat16).astype(jnp.float32)
    w_b = weight.astype(jnp.bfloat16).astype(jnp.float32)
    ref = seq_b @ w_b.T + bias
    assert jnp.allclose(out, ref, atol=1e-4, rtol=1e-4), "mismatch vs bf16-cast reference"

    # Loose check against the full-f32 torch-equivalent forward.
    ref_f32 = seq @ weight.T + bias
    assert jnp.allclose(out, ref_f32, atol=1e-1, rtol=5e-2), "mismatch vs f32 reference"

    print("KERNEL_OK")
</pallas_src>

<mosaic_0001>
module attributes {stable_mosaic.version = 11 : i64} {
  func.func @_logreg_kernel(%arg0: i32, %arg1: memref<8x32xbf16, #tpu.memory_space<vmem>>, %arg2: memref<32x128xbf16, #tpu.memory_space<vmem>>, %arg3: memref<1x8xf32, #tpu.memory_space<vmem>>, %arg4: memref<8x8xf32, #tpu.memory_space<vmem>>) attributes {dimension_semantics = [#tpu.dimension_semantics<parallel>], iteration_bounds = array<i64: 1>, scalar_prefetch = 0 : i64, scratch_operands = 0 : i64, tpu.core_type = #tpu.core_type<tc>, window_params = [{transform_indices = @transform_0, window_bounds = array<i64: 8, 32>}, {pipeline_mode = #tpu.pipeline_mode<synchronous>, transform_indices = @transform_1, window_bounds = array<i64: 32, 128>}, {pipeline_mode = #tpu.pipeline_mode<synchronous>, transform_indices = @transform_2, window_bounds = array<i64: 1, 8>}, {transform_indices = @transform_3, window_bounds = array<i64: 8, 8>}]} {
    %c0 = arith.constant 0 : index
    %c0_0 = arith.constant 0 : index
    %0 = vector.load %arg1[%c0, %c0_0] : memref<8x32xbf16, #tpu.memory_space<vmem>>, vector<8x32xbf16>
    %c0_1 = arith.constant 0 : index
    %c0_2 = arith.constant 0 : index
    %1 = vector.load %arg2[%c0_1, %c0_2] : memref<32x128xbf16, #tpu.memory_space<vmem>>, vector<32x128xbf16>
    %cst = arith.constant dense<0.000000e+00> : vector<8x128xf32>
    %2 = tpu.matmul %0, %1, %cst {dimension_numbers = #tpu.dot_dimension_numbers<[1], [0], [0], [1], [0, 0, 1, 1], [], []>} : vector<8x32xbf16>, vector<32x128xbf16>, vector<8x128xf32> -> vector<8x128xf32>
    %3 = vector.extract_strided_slice %2 {offsets = [0, 0], sizes = [8, 8], strides = [1, 1]} : vector<8x128xf32> to vector<8x8xf32>
    %c0_3 = arith.constant 0 : index
    %c0_4 = arith.constant 0 : index
    %4 = vector.load %arg3[%c0_3, %c0_4] : memref<1x8xf32, #tpu.memory_space<vmem>>, vector<1x8xf32>
    %5 = vector.broadcast %4 : vector<1x8xf32> to vector<8x8xf32>
    %6 = arith.addf %3, %5 : vector<8x8xf32>
    %c0_5 = arith.constant 0 : index
    %c0_6 = arith.constant 0 : index
    %7 = vector.load %arg4[%c0_5, %c0_6] : memref<8x8xf32, #tpu.memory_space<vmem>>, vector<8x8xf32>
    tpu.vector_store %arg4[%c0_5, %c0_6], %6 {strides = array<i32>} : memref<8x8xf32, #tpu.memory_space<vmem>>, vector<8x8xf32>,
    return
  }
  func.func @transform_0(%arg0: i32) -> (i32, i32) {
    %c0_i32 = arith.constant 0 : i32
    %c0_i32_0 = arith.constant 0 : i32
    return %arg0, %c0_i32 : i32, i32
  }
  func.func @transform_1(%arg0: i32) -> (i32, i32) {
    %c0_i32 = arith.constant 0 : i32
    %c0_i32_0 = arith.constant 0 : i32
    %c0_i32_1 = arith.constant 0 : i32
    return %c0_i32, %c0_i32_0 : i32, i32
  }
  func.func @transform_2(%arg0: i32) -> (i32, i32) {
    %c0_i32 = arith.constant 0 : i32
    %c0_i32_0 = arith.constant 0 : i32
    %c0_i32_1 = arith.constant 0 : i32
    return %c0_i32, %c0_i32_0 : i32, i32
  }
  func.func @transform_3(%arg0: i32) -> (i32, i32) {
    %c0_i32 = arith.constant 0 : i32
    %c0_i32_0 = arith.constant 0 : i32
    return %arg0, %c0_i32 : i32, i32
  }
}

</mosaic_0001>

<llo_original>
// kernel: tpu_custom_call.1
$region0: #{tpu_custom_call.1}
  #allocation0 [shape = 'u32[]', space=smem, size = 0x4, offset = 0x4, fixed_abs, tag = 'smem constant byte address 0x4 - core index']
  #allocation1 [shape = 'u32[144,128]{1,0:T(1,128)}', space=vmem, size = 0x12000, scoped, tag = 'internal scratch']
  %s0 = inlined_call_operand.hbm [shape: bf16[8,32], index: 0, kind: input, shape index: {}]
  %s1 = inlined_call_operand.hbm [shape: bf16[32,128], index: 1, kind: input, shape index: {}]
  %s2 = inlined_call_operand.vmem [shape: f32[1,8], index: 2, kind: input, shape index: {}]
  %s3 = inlined_call_operand.hbm [shape: f32[8,8], index: 3, kind: output, shape index: {}]
  %s4 = sld [smem:[#allocation0]]
  $region30: #{tpu_custom_call.1} parent=0
    _
  %s6 = ssub.s32 1, %s4
  %s7 = scalar_select 0, %s6, %s4
  $region1: #{tpu_custom_call.1} parent=0
    #allocation2 [shape = 'u8[2048]{0}', space=vmem, size = 0x800, scoped, tag = 'input window, operand 0, single buffered']
    #allocation3 [shape = 's32[1]{0}', space=sflag, size = 0x4, scoped, tag = 'scoped memory for tpu_custom_call.1']
    #allocation4 [shape = 's32[1]{0}', space=sflag, size = 0x4, scoped, tag = 'scoped memory for tpu_custom_call.1']
    #allocation5 [shape = 'u8[8192]{0}', space=vmem, size = 0x2000, scoped, tag = 'input window, operand 1, single buffered']
    #allocation6 [shape = 's32[1]{0}', space=sflag, size = 0x4, scoped, tag = 'scoped memory for tpu_custom_call.1']
    #allocation7 [shape = 'u8[4096]{0}', space=vmem, size = 0x1000, scoped, tag = 'output window, operand 0, single buffered']
    %8 = vsyncpa [#allocation3], 0
    %9 = vsyncpa [#allocation6], 0
    %10 = vsyncpa [#allocation4], 0
    // Predicated region
    $region2: #{tpu_custom_call.1} parent=1 // pred_check
      _
    $region3: #{tpu_custom_call.1} parent=1 // pred_check_branch
      %12 = sbr.rel (0) target = $region5
    $region4: #{tpu_custom_call.1} parent=1 // pred_region
      %s14 = ssub.s32 64, 64
      %15 = vsyncadd [#allocation3], %s14
      %s17 = sshll.u32 [#allocation2], 4
      %s18 = int_to_ptr.vmem [resolvable:$true] %s17
      %20 = dma.hbm_to_vmem [thread:$0]  %s0, 64, %s18, [#allocation3]
    $region5: #{tpu_custom_call.1} parent=1 // pred_fallthru
      _
    // Predicated region
    $region6: #{tpu_custom_call.1} parent=1 // pred_check
      _
    $region7: #{tpu_custom_call.1} parent=1 // pred_check_branch
      %22 = sbr.rel (0) target = $region9
    $region8: #{tpu_custom_call.1} parent=1 // pred_region
      %s24 = ssub.s32 256, 256
      %25 = vsyncadd [#allocation6], %s24
      %s26 = sshll.u32 [#allocation5], 4
      %s27 = int_to_ptr.vmem [resolvable:$true] %s26
      %32 = dma.hbm_to_vmem [thread:$0]  %s1, 256, %s27, [#allocation6], 64, 64, 4
    $region9: #{tpu_custom_call.1} parent=1 // pred_fallthru
      _
    // Predicated region
    $region10: #{tpu_custom_call.1} parent=1 // pred_check
      _
    $region11: #{tpu_custom_call.1} parent=1 // pred_check_branch
      %34 = sbr.rel (0) target = $region13
    $region12: #{tpu_custom_call.1} parent=1 // pred_region
      _
    $region13: #{tpu_custom_call.1} parent=1 // pred_fallthru
      _
    // Predicated region
    $region14: #{tpu_custom_call.1} parent=1 // pred_check
      _
    $region15: #{tpu_custom_call.1} parent=1 // pred_check_branch
      %36 = sbr.rel (0) target = $region17
    $region16: #{tpu_custom_call.1} parent=1 // pred_region
      %37 = dma.done [#allocation3], 64
    $region17: #{tpu_custom_call.1} parent=1 // pred_fallthru
      _
    // Predicated region
    $region18: #{tpu_custom_call.1} parent=1 // pred_check
      _
    $region19: #{tpu_custom_call.1} parent=1 // pred_check_branch
      %39 = sbr.rel (0) target = $region21
    $region20: #{tpu_custom_call.1} parent=1 // pred_region
      %40 = dma.done [#allocation6], 256
    $region21: #{tpu_custom_call.1} parent=1 // pred_fallthru
      _
    %v42 = vld [vmem:[#allocation2] sm:$0xf]
    %v43 = vld [vmem:[#allocation5] sm:$0xf]
    %v44 = vld [vmem:[#allocation5 + $0x4] sm:$0xf]
    %v45 = vld [vmem:[#allocation5 + $0x8] sm:$0xf]
    %v46 = vld [vmem:[#allocation5 + $0xc] sm:$0xf]
    %v51 = vunpack.c.l.b16 %v43
    %v52 = vunpack.c.l.b16 %v44
    %v53 = vunpack.c.l.b16 %v45
    %v54 = vunpack.c.l.b16 %v46
    %v55 = vpack.c.b16 %v52, %v51
    %v56 = vpack.c.b16 %v54, %v53
    %vm59 = vcmask 261120
    %v61 = vsel %vm59, %v42, 0
    %63 = vmatprep.subr.bf16.mxu0 0
    %64 = vmatpush1.bf16.msra.mxu0 %v55
    %65 = vmatprep.subr.bf16.mxu0 0
    %66 = vmatpush1.bf16.msra.mxu0 %v56
    %67 = vmatprep.subr.bf16.mxu0 0
    %68 = vmatpush1.bf16.msra.mxu0 0
    %69 = vmatprep.subr.bf16.mxu0 0
    %70 = vmatpush1.bf16.msra.mxu0 0
    %71 = vmatprep.subr.bf16.mxu0 0
    %72 = vmatpush1.bf16.msra.mxu0 0
    %73 = vmatprep.subr.bf16.mxu0 0
    %74 = vmatpush1.bf16.msra.mxu0 0
    %75 = vmatprep.subr.bf16.mxu0 0
    %76 = vmatpush1.bf16.msra.mxu0 0
    %77 = vmatprep.subr.bf16.mxu0 0
    %78 = vmatpush1.bf16.msra.mxu0 0
    %79 = vmatprep.subr.bf16.mxu0 0
    %80 = vmatpush1.bf16.msra.mxu0 0
    %81 = vmatprep.subr.bf16.mxu0 0
    %82 = vmatpush1.bf16.msra.mxu0 0
    %83 = vmatprep.subr.bf16.mxu0 0
    %84 = vmatpush1.bf16.msra.mxu0 0
    %85 = vmatprep.subr.bf16.mxu0 0
    %86 = vmatpush1.bf16.msra.mxu0 0
    %87 = vmatprep.subr.bf16.mxu0 0
    %88 = vmatpush1.bf16.msra.mxu0 0
    %89 = vmatprep.subr.bf16.mxu0 0
    %90 = vmatpush1.bf16.msra.mxu0 0
    %91 = vmatprep.subr.bf16.mxu0 0
    %92 = vmatpush1.bf16.msra.mxu0 0
    %93 = vmatprep.subr.bf16.mxu0 0
    %94 = vmatpush1.bf16.msra.mxu0 0
    %95 = vmatprep.mubr.bf16.mxu0 0
    %96 = vmatmul.mubr.bf16.gmra.mrb[0].mxu0 %v61
    %v97 = vpop.f32.mrb[0].mxu0
    %v98 = vadd.f32 0.0, %v97
    %v99 = vpop.f32.mrb[0].mxu0
    %v100 = vpop.f32.mrb[0].mxu0
    %v101 = vpop.f32.mrb[0].mxu0
    %102 = vdwg.mxu0
    %v103 = vld [vmem:[%s2] sm:$0x1]
    %v105 = vlaneseq
    %v106 = vshrl.u32 %v105, 7
    %v107 = vsub.s32 0, %v106
    %v108 = vrot.slane %v103, %v107
    %v110 = vadd.f32 %v98, %v108
    %vm111 = vcmask 64512
    %112 = vst.msk [vmem:[#allocation7] sm:$0xff] %vm111, %v110
    // Predicated region
    $region22: #{tpu_custom_call.1} parent=1 // pred_check
      _
    $region23: #{tpu_custom_call.1} parent=1 // pred_check_branch
      %114 = sbr.rel (0) target = $region25
    $region24: #{tpu_custom_call.1} parent=1 // pred_region
      %s116 = ssub.s32 128, 128
      %117 = vsyncadd [#allocation4], %s116
      %s119 = sshll.u32 [#allocation7], 4
      %s120 = int_to_ptr.vmem [resolvable:$true] %s119
      %122 = dma.vmem_to_hbm [thread:$0]  %s120, 128, %s3, [#allocation4]
    $region25: #{tpu_custom_call.1} parent=1 // pred_fallthru
      _
    // Predicated region
    $region26: #{tpu_custom_call.1} parent=1 // pred_check
      _
    $region27: #{tpu_custom_call.1} parent=1 // pred_check_branch
      %124 = sbr.rel (0) target = $region29
    $region28: #{tpu_custom_call.1} parent=1 // pred_region
      %125 = dma.done [#allocation4], 128
    $region29: #{tpu_custom_call.1} parent=1 // pred_fallthru
      _
    %126 = vsyncpa [#allocation3], 1
    %127 = vsyncpa [#allocation6], 1
    %128 = vsyncpa [#allocation4], 1

</llo_original>
